<compile_context>
chip_gen: v5e
topology: v5e:2x2
jax: 0.10.0
libtpu: 0.0.40
codegen_flags: <defaults>
</compile_context>

<pallas_src>
import functools

import jax
import jax.numpy as jnp
from jax import lax
from jax.experimental import pallas as pl
from jax.experimental.pallas import tpu as pltpu


def _round_up(a, b):
    return ((a + b - 1) // b) * b


# ----------------------------- kernel 1: per-head projection ----------------------------- #
def _project_kernel(x_ref, w_ref, o_ref):
    # x_ref: (tile, F_in)   w_ref: (1, F_in, D)   o_ref: (1, tile, D)
    o_ref[0] = jnp.dot(
        x_ref[...], w_ref[0], preferred_element_type=jnp.float32
    ).astype(o_ref.dtype)


# ------------------- kernel 2: fused attention + edge-softmax + aggregation ------------------ #
def _attend_aggregate_kernel(fs_ref, fd_ref, al_ref, ar_ref, adj_ref, o_ref,
                             *, negative_slope):
    # fs_ref : (1, N, D)       projected features of ALL source nodes (this head)
    # fd_ref : (1, tile, D)    projected features of this dst-row tile (this head)
    # al_ref : (1, 1, D)       attn_l for this head
    # ar_ref : (1, 1, D)       attn_r for this head
    # adj_ref: (tile, N)       adjacency mask, dst rows x src cols
    # o_ref  : (1, tile, D)
    fs = fs_ref[0]                       # (N, D)
    fd = fd_ref[0]                       # (tile, D)
    al = al_ref[0]                       # (1, D)
    ar = ar_ref[0]                       # (1, D)
    adj = adj_ref[...]                   # (tile, N)
    tile = fd.shape[0]

    # el[u] broadcast over dst rows via an MXU matmul (avoids an explicit transpose):
    #   el_bcast[v, u] = sum_d attn_l[d] * fs[u, d]
    al_rows = jnp.broadcast_to(al, (tile, al.shape[-1]))
    el_bcast = lax.dot_general(
        al_rows, fs,
        dimension_numbers=(((1,), (1,)), ((), ())),
        preferred_element_type=jnp.float32)                       # (tile, N)

    # er[v] per dst row (elementwise + lane reduce)
    er_col = jnp.sum(fd * ar, axis=-1, keepdims=True)             # (tile, 1)

    logits = er_col + el_bcast                                    # e[v,u] = el[u] + er[v]
    logits = jnp.where(logits > 0, logits, negative_slope * logits)  # LeakyReLU

    # masked softmax over incoming edges (src axis)
    edge = adj > 0.5
    masked = jnp.where(edge, logits, -1e30)
    m = jnp.max(masked, axis=-1, keepdims=True)
    p = jnp.where(edge, jnp.exp(masked - m), 0.0)
    denom = jnp.maximum(jnp.sum(p, axis=-1, keepdims=True), 1e-12)
    attn = p / denom                                              # (tile, N)

    # aggregation: out[v] = sum_u attn[v, u] * fs[u]
    out = jnp.dot(attn, fs, preferred_element_type=jnp.float32)
    o_ref[0] = out.astype(o_ref.dtype)


# ------------------------------------- wrapper ------------------------------------- #
def gat_conv_forward(x, fc_weight, attn_l, attn_r, adj, *,
                     num_heads, out_feats, negative_slope=0.2, max_tile=512):
    """Default-config GATConv forward.

    x:          (N, F_in)       node features
    fc_weight:  (F_in, H * D)   projection weight (y = x @ fc_weight, no bias)
    attn_l/r:   (1, H, D)       attention vectors
    adj:        (N, N)          dense adjacency mask, adj[v, u] != 0 iff edge u -> v
    returns:    (N, H, D)
    """
    N, f_in = x.shape
    H, D = num_heads, out_feats
    assert fc_weight.shape == (f_in, H * D)
    assert attn_l.shape == (1, H, D) and attn_r.shape == (1, H, D)
    assert adj.shape == (N, N)
    out_dtype = x.dtype

    # Large row tiles (mem-bound kernels want big tiles), capped so the (tile, N_pad)
    # adjacency block and (N_pad, D) source-feature block stay inside the scoped VMEM
    # budget on every generation.  Pad N so the tile divides it (ragged node counts).
    tile = min(max_tile, _round_up(N, 8))
    n_pad = _round_up(N, tile)
    if n_pad != N:
        x = jnp.pad(x, ((0, n_pad - N), (0, 0)))
        adj = jnp.pad(adj, ((0, n_pad - N), (0, n_pad - N)))

    w_heads = fc_weight.reshape(f_in, H, D).transpose(1, 0, 2).astype(jnp.float32)  # (H,F_in,D)
    al = attn_l.reshape(H, 1, D).astype(jnp.float32)
    ar = attn_r.reshape(H, 1, D).astype(jnp.float32)
    adj_f = adj.astype(jnp.float32)
    x_f = x.astype(jnp.float32)

    # 32 MiB scoped VMEM: >= v5e's 16 MiB default, == v6e/v7x default; for very large
    # tiles derive from the actual block footprint and cap per generation via
    # pltpu.get_tpu_info().
    cparams = pltpu.CompilerParams(
        dimension_semantics=("parallel", "parallel"),
        vmem_limit_bytes=32 * 1024 * 1024,
    )

    grid = (H, n_pad // tile)

    # Kernel 1: per-head projection matmul -> feat_proj (H, N_pad, D)
    feat_proj = pl.pallas_call(
        _project_kernel,
        out_shape=jax.ShapeDtypeStruct((H, n_pad, D), jnp.float32),
        grid_spec=pltpu.PrefetchScalarGridSpec(
            num_scalar_prefetch=0,
            grid=grid,
            in_specs=[
                pl.BlockSpec((tile, f_in), lambda h, i: (i, 0)),     # x row tile
                pl.BlockSpec((1, f_in, D), lambda h, i: (h, 0, 0)),  # per-head weight
            ],
            out_specs=pl.BlockSpec((1, tile, D), lambda h, i: (h, i, 0)),
        ),
        compiler_params=cparams,
    )(x_f, w_heads)

    # Kernel 2: fused attention logits + masked edge-softmax + neighbor aggregation
    kernel = functools.partial(_attend_aggregate_kernel, negative_slope=negative_slope)
    out_hnd = pl.pallas_call(
        kernel,
        out_shape=jax.ShapeDtypeStruct((H, n_pad, D), jnp.float32),
        grid_spec=pltpu.PrefetchScalarGridSpec(
            num_scalar_prefetch=0,
            grid=grid,
            in_specs=[
                pl.BlockSpec((1, n_pad, D), lambda h, i: (h, 0, 0)),  # all src feats (head h)
                pl.BlockSpec((1, tile, D), lambda h, i: (h, i, 0)),   # dst tile feats
                pl.BlockSpec((1, 1, D), lambda h, i: (h, 0, 0)),      # attn_l
                pl.BlockSpec((1, 1, D), lambda h, i: (h, 0, 0)),      # attn_r
                pl.BlockSpec((tile, n_pad), lambda h, i: (i, 0)),     # adjacency tile
            ],
            out_specs=pl.BlockSpec((1, tile, D), lambda h, i: (h, i, 0)),
        ),
        compiler_params=cparams,
    )(feat_proj, feat_proj, al, ar, adj_f)

    out = jnp.transpose(out_hnd, (1, 0, 2))[:N]       # (N, H, D)
    return out.astype(out_dtype)


# --------------------------------- pure-JAX reference --------------------------------- #
def gat_conv_reference(x, fc_weight, attn_l, attn_r, adj, negative_slope=0.2):
    N = x.shape[0]
    _, H, D = attn_l.shape
    feat = (x.astype(jnp.float32) @ fc_weight.astype(jnp.float32)).reshape(N, H, D)
    el = jnp.sum(feat * attn_l, axis=-1)                # (N, H)
    er = jnp.sum(feat * attn_r, axis=-1)                # (N, H)
    logits = er[:, None, :] + el[None, :, :]            # (dst, src, H)
    logits = jnp.where(logits > 0, logits, negative_slope * logits)
    edge = (adj > 0.5)[:, :, None]
    masked = jnp.where(edge, logits, -1e30)
    masked = masked - jnp.max(masked, axis=1, keepdims=True)
    p = jnp.where(edge, jnp.exp(masked), 0.0)
    attn = p / jnp.maximum(jnp.sum(p, axis=1, keepdims=True), 1e-12)
    return jnp.einsum("vuh,uhd->vhd", attn, feat)


if __name__ == "__main__":
    N, F_IN, HEADS, OUT_FEATS = 64, 32, 2, 64
    NEG_SLOPE = 0.2

    key = jax.random.PRNGKey(0)
    k_x, k_fc, k_al, k_ar = jax.random.split(key, 4)

    # xavier-normal-ish init with gain = calculate_gain('relu') = sqrt(2), mirroring
    # reset_parameters(); exact init values don't affect forward-pass semantics.
    gain = 2.0 ** 0.5
    std_fc = gain * (2.0 / (F_IN + HEADS * OUT_FEATS)) ** 0.5
    std_attn = gain * (2.0 / (1 + OUT_FEATS)) ** 0.5

    x = jax.random.normal(k_x, (N, F_IN), jnp.float32)
    fc_weight = std_fc * jax.random.normal(k_fc, (F_IN, HEADS * OUT_FEATS), jnp.float32)
    attn_l = std_attn * jax.random.normal(k_al, (1, HEADS, OUT_FEATS), jnp.float32)
    attn_r = std_attn * jax.random.normal(k_ar, (1, HEADS, OUT_FEATS), jnp.float32)

    # Deterministic small graph: self-loops + ring (+ two extra edges).  Every node has
    # in-degree >= 1, satisfying the module's zero-in-degree check.
    idx = jnp.arange(N)
    adj = jnp.zeros((N, N), jnp.float32)
    adj = adj.at[idx, idx].set(1.0)
    adj = adj.at[idx, (idx + 1) % N].set(1.0)
    adj = adj.at[idx, (idx - 1) % N].set(1.0)
    adj = adj.at[0, N // 2].set(1.0)
    adj = adj.at[5, 17].set(1.0)

    y = gat_conv_forward(x, fc_weight, attn_l, attn_r, adj,
                         num_heads=HEADS, out_feats=OUT_FEATS,
                         negative_slope=NEG_SLOPE)
    jax.block_until_ready(y)

    y_ref = gat_conv_reference(x, fc_weight, attn_l, attn_r, adj, NEG_SLOPE)

    assert y.shape == (N, HEADS, OUT_FEATS) and y.dtype == x.dtype
    assert not bool(jnp.any(jnp.isnan(y)))
    # MXU matmuls (default f32 precision regime) in the kernel vs the XLA reference can
    # differ by a few 1e-3 per element; use a correspondingly loose smoke-test tolerance.
    assert jnp.allclose(y, y_ref, atol=3e-2, rtol=3e-2), float(jnp.max(jnp.abs(y - y_ref)))

    print("KERNEL_OK")
</pallas_src>

<mosaic_0001>
module attributes {stable_mosaic.version = 11 : i64} {
  func.func @_project_kernel(%arg0: i32, %arg1: i32, %arg2: memref<64x32xf32, #tpu.memory_space<vmem>>, %arg3: memref<1x32x64xf32, #tpu.memory_space<vmem>>, %arg4: memref<1x64x64xf32, #tpu.memory_space<vmem>>) attributes {dimension_semantics = [#tpu.dimension_semantics<parallel>, #tpu.dimension_semantics<parallel>], iteration_bounds = array<i64: 2, 1>, scalar_prefetch = 0 : i64, scratch_operands = 0 : i64, tpu.core_type = #tpu.core_type<tc>, window_params = [{transform_indices = @transform_0, window_bounds = array<i64: 64, 32>}, {transform_indices = @transform_1, window_bounds = array<i64: 1, 32, 64>}, {transform_indices = @transform_2, window_bounds = array<i64: 1, 64, 64>}]} {
    %c0 = arith.constant 0 : index
    %c0_0 = arith.constant 0 : index
    %0 = vector.load %arg2[%c0, %c0_0] : memref<64x32xf32, #tpu.memory_space<vmem>>, vector<64x32xf32>
    %c0_1 = arith.constant 0 : index
    %c0_2 = arith.constant 0 : index
    %c0_3 = arith.constant 0 : index
    %1 = vector.load %arg3[%c0_1, %c0_2, %c0_3] : memref<1x32x64xf32, #tpu.memory_space<vmem>>, vector<1x32x64xf32>
    %2 = vector.shape_cast %1 : vector<1x32x64xf32> to vector<32x64xf32>
    %cst = arith.constant dense<0.000000e+00> : vector<64x64xf32>
    %3 = tpu.matmul %0, %2, %cst {dimension_numbers = #tpu.dot_dimension_numbers<[1], [0], [0], [1], [0, 0, 1, 1], [], []>} : vector<64x32xf32>, vector<32x64xf32>, vector<64x64xf32> -> vector<64x64xf32>
    %c0_4 = arith.constant 0 : index
    %c0_5 = arith.constant 0 : index
    %c0_6 = arith.constant 0 : index
    %4 = vector.load %arg4[%c0_4, %c0_5, %c0_6] : memref<1x64x64xf32, #tpu.memory_space<vmem>>, vector<1x64x64xf32>
    %5 = vector.shape_cast %4 : vector<1x64x64xf32> to vector<64x64xf32>
    %6 = vector.shape_cast %3 : vector<64x64xf32> to vector<1x64x64xf32>
    tpu.vector_store %arg4[%c0_4, %c0_5, %c0_6], %6 {strides = array<i32>} : memref<1x64x64xf32, #tpu.memory_space<vmem>>, vector<1x64x64xf32>,
    return
  }
  func.func @transform_0(%arg0: i32, %arg1: i32) -> (i32, i32) {
    %c0_i32 = arith.constant 0 : i32
    %c0_i32_0 = arith.constant 0 : i32
    return %arg1, %c0_i32 : i32, i32
  }
  func.func @transform_1(%arg0: i32, %arg1: i32) -> (i32, i32, i32) {
    %c0_i32 = arith.constant 0 : i32
    %c0_i32_0 = arith.constant 0 : i32
    %c0_i32_1 = arith.constant 0 : i32
    return %arg0, %c0_i32, %c0_i32_0 : i32, i32, i32
  }
  func.func @transform_2(%arg0: i32, %arg1: i32) -> (i32, i32, i32) {
    %c0_i32 = arith.constant 0 : i32
    %c0_i32_0 = arith.constant 0 : i32
    return %arg0, %arg1, %c0_i32 : i32, i32, i32
  }
}

</mosaic_0001>

<llo_original>
// kernel: tpu_custom_call.1
$region0: #{tpu_custom_call.1}
  #allocation0 [shape = 'u32[]', space=smem, size = 0x4, offset = 0x4, fixed_abs, tag = 'smem constant byte address 0x4 - core index']
  #allocation1 [shape = 'u32[72,128]{1,0:T(1,128)}', space=vmem, size = 0x9000, scoped, tag = 'internal scratch']
  %s0 = inlined_call_operand.vmem [shape: f32[64,32], index: 0, kind: input, shape index: {}]
  %s1 = inlined_call_operand.vmem [shape: f32[2,32,64], index: 1, kind: input, shape index: {}]
  %s2 = inlined_call_operand.hbm [shape: f32[2,64,64], index: 2, kind: output, shape index: {}]
  %s3 = sld [smem:[#allocation0]]
  $region41: #{tpu_custom_call.1} parent=0
    _
  %s5 = ssub.s32 1, %s3
  %s6 = scalar_select 0, %s5, %s3
  $region1: #{tpu_custom_call.1} parent=0
    #allocation2 [shape = 'u8[65536]{0}', space=vmem, size = 0x10000, scoped, tag = 'output window, operand 0']
    #allocation3 [shape = 's32[2]{0}', space=sflag, size = 0x8, scoped, tag = 'scoped memory for tpu_custom_call.1']
    %7 = vsyncpa [#allocation3], 0
    %s8 = scalar_lea.sflag [#allocation3], 1
    %9 = vsyncpa %s8, 0
    loop: start=0, step=1, limit=4
    $region2: #{tpu_custom_call.1} parent=1 // loop_pre_header
      _
    $region3: #{tpu_custom_call.1} parent=1 // loop_header
      %s11 = sphi 0, %s15
      %p12 = scmp.ge.s32.totalorder %s11, 4
      %s18 = sphi 0, %s30
      %s19 = sphi 0, %s26
      %s20 = sphi 0, %s18
      %s21 = sphi 0, %s19
      %s22 = sphi 0, %s20
      %s23 = sphi 0, %s21
      %s33 = sphi 0, %s35
      %s36 = sphi 0, %s33
      %s37 = sphi 0, %s36
      %s53 = sphi 0, %s37
      %s59 = sphi 0, %s61
      %s62 = sphi 0, %s59
      %s63 = sphi 0, %s62
      %s79 = sphi 0, %s63
      %s87 = sphi 0, %s89
      %s90 = sphi 0, %s87
      %s91 = sphi 0, %s90
      %s107 = sphi 0, %s91
    $region4: #{tpu_custom_call.1} parent=1 // loop_header_branch
      %14 = sbr.rel (%p12) target = $region8
    $region5: #{tpu_custom_call.1} parent=1 // loop_body
      %s16 = ssub.s32 %s11, 1
      %s17 = ssub.s32 %s11, 2
      %s24 = sadd.s32 1, %s19
      %p25 = scmp.ge.s32.totalorder %s24, 1
      %s26 = scalar_select %p25, 0, %s24
      %s27 = sadd.s32 1, %s18
      %s28 = scalar_select %p25, %s27, %s18
      %p29 = scmp.ge.s32.totalorder %s28, 2
      %s30 = scalar_select %p29, 0, %s28
      %s31 = ssub.s32 %s19, %s26
      %p32 = scmp.eq.s32.totalorder %s31, 0
      %s34 = sadd.s32 %s33, 1
      %s35 = scalar_select %p32, %s33, %s34
      %p38 = pneg %p32
      %p39 = scmp.eq.s32.totalorder %s11, 1
      %p40 = por %p38, %p39
      %p41 = scmp.ne.s32.totalorder %s33, %s36
      %p42 = scmp.eq.s32.totalorder %s11, 0
      %p43 = por %p41, %p42
      %p44 = scmp.ne.s32.totalorder %s33, %s36
      %p45 = scmp.eq.s32.totalorder %s16, 1
      %p46 = por %p44, %p45
      %p47 = scmp.ne.s32.totalorder %s36, %s37
      %p48 = scmp.eq.s32.totalorder %s16, 0
      %p49 = por %p47, %p48
      %p50 = scmp.ne.s32.totalorder %s36, %s37
      %p51 = scmp.eq.s32.totalorder %s17, 1
      %p52 = por %p50, %p51
      %p54 = scmp.ne.s32.totalorder %s37, %s53
      %p55 = scmp.eq.s32.totalorder %s17, 0
      %p56 = por %p54, %p55
      %s57 = ssub.s32 %s18, %s30
      %p58 = scmp.eq.s32.totalorder %s57, 0
      %s60 = sadd.s32 %s59, 1
      %s61 = scalar_select %p58, %s59, %s60
      %p64 = pneg %p58
      %p65 = scmp.eq.s32.totalorder %s11, 1
      %p66 = por %p64, %p65
      %p67 = scmp.ne.s32.totalorder %s59, %s62
      %p68 = scmp.eq.s32.totalorder %s11, 0
      %p69 = por %p67, %p68
      %p70 = scmp.ne.s32.totalorder %s59, %s62
      %p71 = scmp.eq.s32.totalorder %s16, 1
      %p72 = por %p70, %p71
      %p73 = scmp.ne.s32.totalorder %s62, %s63
      %p74 = scmp.eq.s32.totalorder %s16, 0
      %p75 = por %p73, %p74
      %p76 = scmp.ne.s32.totalorder %s62, %s63
      %p77 = scmp.eq.s32.totalorder %s17, 1
      %p78 = por %p76, %p77
      %p80 = scmp.ne.s32.totalorder %s63, %s79
      %p81 = scmp.eq.s32.totalorder %s17, 0
      %p82 = por %p80, %p81
      %s83 = ssub.s32 %s18, %s30
      %s84 = ssub.s32 %s19, %s26
      %s85 = sor.u32 %s83, %s84
      %p86 = scmp.eq.s32.totalorder %s85, 0
      %s88 = sadd.s32 %s87, 1
      %s89 = scalar_select %p86, %s87, %s88
      %p92 = pneg %p86
      %p93 = scmp.eq.s32.totalorder %s11, 1
      %p94 = por %p92, %p93
      %p95 = scmp.ne.s32.totalorder %s87, %s90
      %p96 = scmp.eq.s32.totalorder %s11, 0
      %p97 = por %p95, %p96
      %p98 = scmp.ne.s32.totalorder %s87, %s90
      %p99 = scmp.eq.s32.totalorder %s16, 1
      %p100 = por %p98, %p99
      %p101 = scmp.ne.s32.totalorder %s90, %s91
      %p102 = scmp.eq.s32.totalorder %s16, 0
      %p103 = por %p101, %p102
      %p104 = scmp.ne.s32.totalorder %s90, %s91
      %p105 = scmp.eq.s32.totalorder %s17, 1
      %p106 = por %p104, %p105
      %p108 = scmp.ne.s32.totalorder %s91, %s107
      %p109 = scmp.eq.s32.totalorder %s17, 0
      %p110 = por %p108, %p109
      %p111 = scmp.le.s32.totalorder 1, %s11
      %p112 = scmp.lt.s32.totalorder %s11, 3
      %p113 = pnand %p111, %p112
      %p114 = pneg %p113
      // Predicated region
      $region9: #{tpu_custom_call.1} parent=5 // pred_check
        _
      $region10: #{tpu_custom_call.1} parent=5 // pred_check_branch
        %116 = sbr.rel (%p113) target = $region12
      $region11: #{tpu_custom_call.1} parent=5 // pred_region
        %s117 = ssub.s32 %s11, 1
        // Predicated region
        $region13: #{tpu_custom_call.1} parent=11 // pred_check
          %p118 = pneg %p49
        $region14: #{tpu_custom_call.1} parent=11 // pred_check_branch
          %120 = sbr.rel (%p118) target = $region16
        $region15: #{tpu_custom_call.1} parent=11 // pred_region
          %s121 = smul.u32 8, %s21
          %p122 = scmp.lt.s32.totalorder %s121, 7
          %s123 = scalar_select %p122, %s121, 7
          %s124 = smul.addr %s123, 8
          %s125 = scalar_lea.vmem %s0, %s124
          %s126 = smul.u32 8, %s21
        $region16: #{tpu_custom_call.1} parent=11 // pred_fallthru
          _
      $region12: #{tpu_custom_call.1} parent=5 // pred_fallthru
        _
      %p127 = scmp.lt.s32.totalorder %s11, 2
      // Predicated region
      $region17: #{tpu_custom_call.1} parent=5 // pred_check
        %p128 = pneg %p127
      $region18: #{tpu_custom_call.1} parent=5 // pred_check_branch
        %130 = sbr.rel (%p128) target = $region20
      $region19: #{tpu_custom_call.1} parent=5 // pred_region
        // Predicated region
        $region21: #{tpu_custom_call.1} parent=19 // pred_check
          %p131 = pneg %p69
        $region22: #{tpu_custom_call.1} parent=19 // pred_check_branch
          %133 = sbr.rel (%p131) target = $region24
        $region23: #{tpu_custom_call.1} parent=19 // pred_region
          %p134 = scmp.lt.s32.totalorder %s18, 1
          %s135 = scalar_select %p134, %s18, 1
          %s136 = smul.addr %s135, 4
          %s137 = smul.addr %s136, 8
          %s138 = scalar_lea.vmem %s1, %s137
        $region24: #{tpu_custom_call.1} parent=19 // pred_fallthru
          _
      $region20: #{tpu_custom_call.1} parent=5 // pred_fallthru
        _
      %p139 = scmp.le.s32.totalorder 1, %s11
      %p140 = scmp.lt.s32.totalorder %s11, 3
      %p141 = pnand %p139, %p140
      %p142 = pneg %p141
      // Predicated region
      $region25: #{tpu_custom_call.1} parent=5 // pred_check
        _
      $region26: #{tpu_custom_call.1} parent=5 // pred_check_branch
        %144 = sbr.rel (%p141) target = $region28
      $region27: #{tpu_custom_call.1} parent=5 // pred_region
        %s145 = ssub.s32 %s11, 1
        %s146 = smul.u32 8, %s21
        %p147 = scmp.lt.s32.totalorder %s146, 7
        %s148 = scalar_select %p147, %s146, 7
        %s149 = smul.addr %s148, 8
        %s150 = scalar_lea.vmem %s0, %s149
        %p151 = pneg %p49
        %p152 = pneg %p46
        %p153 = scmp.lt.s32.totalorder %s20, 1
        %s154 = scalar_select %p153, %s20, 1
        %s155 = smul.addr %s154, 4
        %s156 = smul.addr %s155, 8
        %s157 = scalar_lea.vmem %s1, %s156
        %p158 = pneg %p75
        %p159 = pneg %p72
        %p160 = pneg %p103
        %p161 = pneg %p100
        %s162 = sand.u32 %s90, 1
        %s163 = scalar_lea.sflag [#allocation3], %s162
        %s164 = sand.u32 %s90, 1
        %s165 = smul.addr %s164, 64
        %s166 = scalar_lea.vmem [#allocation2], %s165
        %s167 = smul.u32 8, %s21
        %p168 = scmp.lt.s32.totalorder %s167, 7
        %s169 = scalar_select %p168, %s167, 7
        %s170 = smul.addr %s169, 8
        %s171 = scalar_lea.vmem %s0, %s170
        %s172 = smul.u32 8, %s21
        %p173 = scmp.lt.s32.totalorder %s20, 1
        %s174 = scalar_select %p173, %s20, 1
        %s175 = smul.addr %s174, 4
        %s176 = smul.addr %s175, 8
        %s177 = scalar_lea.vmem %s1, %s176
        %s178 = smul.u32 8, %s21
        %v179 = vld [vmem:[%s171] sm:$0xff]
        %v180 = vld [vmem:[%s171 + $0x8] sm:$0xff]
        %v181 = vld [vmem:[%s171 + $0x10] sm:$0xff]
        %v182 = vld [vmem:[%s171 + $0x18] sm:$0xff]
        %v183 = vld [vmem:[%s171 + $0x20] sm:$0xff]
        %v184 = vld [vmem:[%s171 + $0x28] sm:$0xff]
        %v185 = vld [vmem:[%s171 + $0x30] sm:$0xff]
        %v186 = vld [vmem:[%s171 + $0x38] sm:$0xff]
        %v187 = vld [vmem:[%s177] sm:$0xff]
        %v188 = vld [vmem:[%s177 + $0x8] sm:$0xff]
        %v189 = vld [vmem:[%s177 + $0x10] sm:$0xff]
        %v190 = vld [vmem:[%s177 + $0x18] sm:$0xff]
        %vm191 = vcmask 261120
        %v193 = vsel %vm191, %v179, 0
        %v196 = vsel %vm191, %v180, 0
        %v199 = vsel %vm191, %v181, 0
        %v202 = vsel %vm191, %v182, 0
        %v205 = vsel %vm191, %v183, 0
        %v208 = vsel %vm191, %v184, 0
        %v211 = vsel %vm191, %v185, 0
        %v214 = vsel %vm191, %v186, 0
        %216 = vmatpush.msra.mxu0 0.0
        %217 = vmatpush.msra.mxu0 0.0
        %218 = vmatpush.msra.mxu0 0.0
        %219 = vmatpush.msra.mxu0 0.0
        %220 = vmatpush.msra.mxu0 0.0
        %221 = vmatpush.msra.mxu0 0.0
        %222 = vmatpush.msra.mxu0 0.0
        %223 = vmatpush.msra.mxu0 0.0
        %224 = vmatpush.msra.mxu0 0.0
        %225 = vmatpush.msra.mxu0 0.0
        %226 = vmatpush.msra.mxu0 0.0
        %227 = vmatpush.msra.mxu0 0.0
        %228 = vmatpush.msra.mxu0 %v190
        %229 = vmatpush.msra.mxu0 %v189
        %230 = vmatpush.msra.mxu0 %v188
        %231 = vmatpush.msra.mxu0 %v187
        %232 = vmatmul.f32.gmra.mxu0 %v193
        %v233 = vpop.f32.mrf.mxu0
        %v234 = vadd.f32 0.0, %v233
        %235 = vmatmul.f32.gmra.mxu0 %v196
        %v236 = vpop.f32.mrf.mxu0
        %v237 = vadd.f32 0.0, %v236
        %238 = vmatmul.f32.gmra.mxu0 %v199
        %v239 = vpop.f32.mrf.mxu0
        %v240 = vadd.f32 0.0, %v239
        %241 = vmatmul.f32.gmra.mxu0 %v202
        %v242 = vpop.f32.mrf.mxu0
        %v243 = vadd.f32 0.0, %v242
        %244 = vmatmul.f32.gmra.mxu0 %v205
        %v245 = vpop.f32.mrf.mxu0
        %v246 = vadd.f32 0.0, %v245
        %247 = vmatmul.f32.gmra.mxu0 %v208
        %v248 = vpop.f32.mrf.mxu0
        %v249 = vadd.f32 0.0, %v248
        %250 = vmatmul.f32.gmra.mxu0 %v211
        %v251 = vpop.f32.mrf.mxu0
        %v252 = vadd.f32 0.0, %v251
        %253 = vmatmul.f32.gmra.mxu0 %v214
        %v254 = vpop.f32.mrf.mxu0
        %v255 = vadd.f32 0.0, %v254
        %256 = vdwg.mxu0
        %vm257 = vcmask 523264
        %258 = vst.msk [vmem:[%s166] sm:$0xff] %vm257, %v234
        %259 = vst.msk [vmem:[%s166 + $0x8] sm:$0xff] %vm257, %v237
        %260 = vst.msk [vmem:[%s166 + $0x10] sm:$0xff] %vm257, %v240
        %261 = vst.msk [vmem:[%s166 + $0x18] sm:$0xff] %vm257, %v243
        %262 = vst.msk [vmem:[%s166 + $0x20] sm:$0xff] %vm257, %v246
        %263 = vst.msk [vmem:[%s166 + $0x28] sm:$0xff] %vm257, %v249
        %264 = vst.msk [vmem:[%s166 + $0x30] sm:$0xff] %vm257, %v252
        %265 = vst.msk [vmem:[%s166 + $0x38] sm:$0xff] %vm257, %v255
        %s266 = sand.u32 %s90, 1
        %s267 = scalar_lea.sflag [#allocation3], %s266
        %s268 = sand.u32 %s90, 1
        %s269 = smul.addr %s268, 64
        %s270 = scalar_lea.vmem [#allocation2], %s269
        // Predicated region
        $region29: #{tpu_custom_call.1} parent=27 // pred_check
          %p271 = pneg %p100
        $region30: #{tpu_custom_call.1} parent=27 // pred_check_branch
          %273 = sbr.rel (%p271) target = $region32
        $region31: #{tpu_custom_call.1} parent=27 // pred_region
          %s274 = smul.u32 8, %s21
          %276 = vsyncadd %s267, 0
          %s277 = smul.addr %s20, 8
          %s278 = sadd.s32 %s274, %s277
          %s279 = smul.addr %s278, 8
          %s280 = scalar_lea.hbm %s2, %s279
          %s281 = sshll.u32 %s270, 4
          %s282 = int_to_ptr.vmem [resolvable:$true] %s281
          %s283 = sshll.u32 %s280, 4
          %s284 = int_to_ptr.hbm [resolvable:$true] %s283
          %289 = dma.vmem_to_hbm [thread:$0]  %s282, 1024, %s284, %s267, 128, 128, 8
        $region32: #{tpu_custom_call.1} parent=27 // pred_fallthru
          _
      $region28: #{tpu_custom_call.1} parent=5 // pred_fallthru
        _
      %p290 = scmp.le.s32.totalorder 2, %s11
      // Predicated region
      $region33: #{tpu_custom_call.1} parent=5 // pred_check
        %p291 = pneg %p290
      $region34: #{tpu_custom_call.1} parent=5 // pred_check_branch
        %293 = sbr.rel (%p291) target = $region36
      $region35: #{tpu_custom_call.1} parent=5 // pred_region
        %s294 = ssub.s32 %s11, 2
        // Predicated region
        $region37: #{tpu_custom_call.1} parent=35 // pred_check
          %p295 = pneg %p106
        $region38: #{tpu_custom_call.1} parent=35 // pred_check_branch
          %297 = sbr.rel (%p295) target = $region40
        $region39: #{tpu_custom_call.1} parent=35 // pred_region
          %s298 = sand.u32 %s91, 1
          %s299 = scalar_lea.sflag [#allocation3], %s298
          %s300 = sand.u32 %s91, 1
          %s301 = smul.addr %s300, 64
          %s302 = scalar_lea.vmem [#allocation2], %s301
          %304 = dma.done %s299, 1024
        $region40: #{tpu_custom_call.1} parent=35 // pred_fallthru
          _
      $region36: #{tpu_custom_call.1} parent=5 // pred_fallthru
        _
    $region6: #{tpu_custom_call.1} parent=1 // loop_footer
      %s15 = sadd.s32 1, %s11
    $region7: #{tpu_custom_call.1} parent=1 // loop_footer_branch
      %10 = sbr.rel target = $region3
    $region8: #{tpu_custom_call.1} parent=1 // loop_exit
      _
    %305 = vsyncpa [#allocation3], 1
    %s306 = scalar_lea.sflag [#allocation3], 1
    %307 = vsyncpa %s306, 1

</llo_original>
